<compile_context>
chip_gen: v6e
topology: v6e:2x2x1
jax: 0.10.0
libtpu: 0.0.40
codegen_flags: <defaults>
</compile_context>

<pallas_src>
import jax
import jax.numpy as jnp
from jax.experimental import pallas as pl
from jax.experimental.pallas import tpu as pltpu


def _make_naive_lr_kernel(slope: float, intercept: float, out_dtype):
    m = float(slope)
    b = float(intercept)

    def kernel(x_ref, o_ref):
        # Compute in f32 regardless of input precision, cast only at the store.
        x = x_ref[...].astype(jnp.float32)
        o_ref[...] = (m * x + b).astype(out_dtype)

    return kernel


def naive_lr(x: jax.Array, slope: float, intercept: float) -> jax.Array:
    """Elementwise y = slope * x + intercept, computed in a Pallas kernel."""
    orig_shape = x.shape
    orig_dtype = x.dtype
    total = x.size

    # Lane-dense, wide last dim (multiple of 128).
    W = 1024
    SUBLANE = 8

    flat = x.reshape(-1)

    # Pad flat length to a multiple of 8*W so the slab is (rows, W) with
    # rows % 8 == 0: every DMA / vector store stays tile-aligned. The padded
    # tail is computed on garbage/zeros and dropped afterwards.
    unit = SUBLANE * W
    padded_total = -(-total // unit) * unit
    pad = padded_total - total
    if pad:
        flat = jnp.pad(flat, (0, pad))
    rows = padded_total // W
    x2d = flat.reshape(rows, W)

    # ~4 MiB blocks: big enough to amortize per-grid-step overhead (near HBM
    # roofline), small enough for v7x's 64 MiB (32 MiB scoped) VMEM budget.
    itemsize = jnp.dtype(orig_dtype).itemsize
    block_rows = (4 * 1024 * 1024) // (W * itemsize)
    block_rows = max(SUBLANE, (block_rows // SUBLANE) * SUBLANE)
    block_rows = min(block_rows, rows)

    grid = (pl.cdiv(rows, block_rows),)

    kernel = _make_naive_lr_kernel(slope, intercept, orig_dtype)

    out2d = pl.pallas_call(
        kernel,
        out_shape=jax.ShapeDtypeStruct((rows, W), orig_dtype),
        grid_spec=pltpu.PrefetchScalarGridSpec(
            num_scalar_prefetch=0,
            grid=grid,
            in_specs=[pl.BlockSpec((block_rows, W), lambda i: (i, 0))],
            out_specs=pl.BlockSpec((block_rows, W), lambda i: (i, 0)),
        ),
        compiler_params=pltpu.CompilerParams(
            dimension_semantics=("parallel",),
            vmem_limit_bytes=32 * 1024 * 1024,
        ),
    )(x2d)

    out_flat = out2d.reshape(-1)
    if pad:
        out_flat = out_flat[:total]
    return out_flat.reshape(orig_shape)


if __name__ == "__main__":
    # Deterministic parameter init (module __init__ takes slope & intercept scalars).
    slope = 1.75
    intercept = -0.25

    key = jax.random.PRNGKey(0)
    x = jax.random.normal(key, (2, 4, 16, 16), dtype=jnp.float32)  # NCHW

    y = naive_lr(x, slope, intercept)
    y = jax.block_until_ready(y)

    # Reference check against plain JAX.
    y_ref = slope * x + intercept
    assert y.shape == x.shape and y.dtype == x.dtype
    assert jnp.allclose(y, y_ref, atol=1e-6, rtol=1e-6)

    print("KERNEL_OK")
</pallas_src>

<mosaic_0001>
module attributes {stable_mosaic.version = 11 : i64} {
  func.func @kernel(%arg0: i32, %arg1: memref<8x1024xf32, #tpu.memory_space<vmem>>, %arg2: memref<8x1024xf32, #tpu.memory_space<vmem>>) attributes {dimension_semantics = [#tpu.dimension_semantics<parallel>], iteration_bounds = array<i64: 1>, scalar_prefetch = 0 : i64, scratch_operands = 0 : i64, tpu.core_type = #tpu.core_type<tc>, window_params = [{transform_indices = @transform_0, window_bounds = array<i64: 8, 1024>}, {transform_indices = @transform_1, window_bounds = array<i64: 8, 1024>}]} {
    %c0 = arith.constant 0 : index
    %c0_0 = arith.constant 0 : index
    %0 = vector.load %arg1[%c0, %c0_0] : memref<8x1024xf32, #tpu.memory_space<vmem>>, vector<8x1024xf32>
    %cst = arith.constant 1.750000e+00 : f32
    %1 = vector.broadcast %cst : f32 to vector<8x1024xf32>
    %2 = arith.mulf %1, %0 : vector<8x1024xf32>
    %cst_1 = arith.constant -2.500000e-01 : f32
    %3 = vector.broadcast %cst_1 : f32 to vector<8x1024xf32>
    %4 = arith.addf %2, %3 : vector<8x1024xf32>
    %c0_2 = arith.constant 0 : index
    %c0_3 = arith.constant 0 : index
    %5 = vector.load %arg2[%c0_2, %c0_3] : memref<8x1024xf32, #tpu.memory_space<vmem>>, vector<8x1024xf32>
    tpu.vector_store %arg2[%c0_2, %c0_3], %4 {strides = array<i32>} : memref<8x1024xf32, #tpu.memory_space<vmem>>, vector<8x1024xf32>,
    return
  }
  func.func @transform_0(%arg0: i32) -> (i32, i32) {
    %c0_i32 = arith.constant 0 : i32
    %c0_i32_0 = arith.constant 0 : i32
    return %arg0, %c0_i32 : i32, i32
  }
  func.func @transform_1(%arg0: i32) -> (i32, i32) {
    %c0_i32 = arith.constant 0 : i32
    %c0_i32_0 = arith.constant 0 : i32
    return %arg0, %c0_i32 : i32, i32
  }
}

</mosaic_0001>

<llo_original>
// kernel: tpu_custom_call.1
$region0: #{tpu_custom_call.1}
  #allocation0 [shape = 'u32[]', space=smem, size = 0x4, offset = 0x4, fixed_abs, tag = 'smem constant byte address 0x4 - core index']
  #allocation1 [shape = 'u32[144,128]{1,0:T(1,128)}', space=vmem, size = 0x12000, scoped, tag = 'internal scratch']
  %s0 = inlined_call_operand.hbm [shape: f32[8,1024], index: 0, kind: input, shape index: {}]
  %s1 = inlined_call_operand.hbm [shape: f32[8,1024], index: 1, kind: output, shape index: {}]
  %s2 = sld [smem:[#allocation0]]
  $region18: #{tpu_custom_call.1} parent=0
    _
  %s4 = ssub.s32 1, %s2
  %s5 = scalar_select 0, %s4, %s2
  $region1: #{tpu_custom_call.1} parent=0
    #allocation2 [shape = 'u8[32768]{0}', space=vmem, size = 0x8000, scoped, tag = 'input window, operand 0, single buffered']
    #allocation3 [shape = 's32[1]{0}', space=sflag, size = 0x4, scoped, tag = 'scoped memory for tpu_custom_call.1']
    #allocation4 [shape = 's32[1]{0}', space=sflag, size = 0x4, scoped, tag = 'scoped memory for tpu_custom_call.1']
    #allocation5 [shape = 'u8[32768]{0}', space=vmem, size = 0x8000, scoped, tag = 'output window, operand 0, single buffered']
    %6 = vsyncpa [#allocation3], 0
    %7 = vsyncpa [#allocation4], 0
    // Predicated region
    $region2: #{tpu_custom_call.1} parent=1 // pred_check
      _
    $region3: #{tpu_custom_call.1} parent=1 // pred_check_branch
      %9 = sbr.rel (0) target = $region5
    $region4: #{tpu_custom_call.1} parent=1 // pred_region
      %s11 = ssub.s32 1024, 1024
      %12 = vsyncadd [#allocation3], %s11
      %s14 = sshll.u32 [#allocation2], 4
      %s15 = int_to_ptr.vmem [resolvable:$true] %s14
      %17 = dma.hbm_to_vmem [thread:$0]  %s0, 1024, %s15, [#allocation3]
    $region5: #{tpu_custom_call.1} parent=1 // pred_fallthru
      _
    // Predicated region
    $region6: #{tpu_custom_call.1} parent=1 // pred_check
      _
    $region7: #{tpu_custom_call.1} parent=1 // pred_check_branch
      %19 = sbr.rel (0) target = $region9
    $region8: #{tpu_custom_call.1} parent=1 // pred_region
      %20 = dma.done [#allocation3], 1024
    $region9: #{tpu_custom_call.1} parent=1 // pred_fallthru
      _
    %v21 = vld [vmem:[#allocation2] sm:$0xff]
    %v22 = vld [vmem:[#allocation2 + $0x8] sm:$0xff]
    %v23 = vld [vmem:[#allocation2 + $0x10] sm:$0xff]
    %v24 = vld [vmem:[#allocation2 + $0x18] sm:$0xff]
    %v25 = vld [vmem:[#allocation2 + $0x20] sm:$0xff]
    %v26 = vld [vmem:[#allocation2 + $0x28] sm:$0xff]
    %v27 = vld [vmem:[#allocation2 + $0x30] sm:$0xff]
    %v28 = vld [vmem:[#allocation2 + $0x38] sm:$0xff]
    %v29 = vmul.f32 %v21, 1.75
    %v30 = vmul.f32 %v22, 1.75
    %v31 = vmul.f32 %v23, 1.75
    %v32 = vmul.f32 %v24, 1.75
    %v33 = vmul.f32 %v25, 1.75
    %v34 = vmul.f32 %v26, 1.75
    %v35 = vmul.f32 %v27, 1.75
    %v36 = vmul.f32 %v28, 1.75
    %v37 = vadd.f32 %v29, -0.25
    %v38 = vadd.f32 %v30, -0.25
    %v39 = vadd.f32 %v31, -0.25
    %v40 = vadd.f32 %v32, -0.25
    %v41 = vadd.f32 %v33, -0.25
    %v42 = vadd.f32 %v34, -0.25
    %v43 = vadd.f32 %v35, -0.25
    %v44 = vadd.f32 %v36, -0.25
    %45 = vst [vmem:[#allocation5] sm:$0xff] %v37
    %46 = vst [vmem:[#allocation5 + $0x8] sm:$0xff] %v38
    %47 = vst [vmem:[#allocation5 + $0x10] sm:$0xff] %v39
    %48 = vst [vmem:[#allocation5 + $0x18] sm:$0xff] %v40
    %49 = vst [vmem:[#allocation5 + $0x20] sm:$0xff] %v41
    %50 = vst [vmem:[#allocation5 + $0x28] sm:$0xff] %v42
    %51 = vst [vmem:[#allocation5 + $0x30] sm:$0xff] %v43
    %52 = vst [vmem:[#allocation5 + $0x38] sm:$0xff] %v44
    // Predicated region
    $region10: #{tpu_custom_call.1} parent=1 // pred_check
      _
    $region11: #{tpu_custom_call.1} parent=1 // pred_check_branch
      %54 = sbr.rel (0) target = $region13
    $region12: #{tpu_custom_call.1} parent=1 // pred_region
      %s56 = ssub.s32 1024, 1024
      %57 = vsyncadd [#allocation4], %s56
      %s59 = sshll.u32 [#allocation5], 4
      %s60 = int_to_ptr.vmem [resolvable:$true] %s59
      %62 = dma.vmem_to_hbm [thread:$0]  %s60, 1024, %s1, [#allocation4]
    $region13: #{tpu_custom_call.1} parent=1 // pred_fallthru
      _
    // Predicated region
    $region14: #{tpu_custom_call.1} parent=1 // pred_check
      _
    $region15: #{tpu_custom_call.1} parent=1 // pred_check_branch
      %64 = sbr.rel (0) target = $region17
    $region16: #{tpu_custom_call.1} parent=1 // pred_region
      %65 = dma.done [#allocation4], 1024
    $region17: #{tpu_custom_call.1} parent=1 // pred_fallthru
      _
    %66 = vsyncpa [#allocation3], 1
    %67 = vsyncpa [#allocation4], 1

</llo_original>
